<compile_context>
chip_gen: v5e
topology: v5e:2x2
jax: 0.10.0
libtpu: 0.0.40
codegen_flags: <defaults>
</compile_context>

<pallas_src>
import functools

import jax
import jax.numpy as jnp
from jax import lax
from jax.experimental import pallas as pl
from jax.experimental.pallas import tpu as pltpu


_MODE_CHUNK = 128      # modes per in-kernel matmul; keeps stores 128-lane aligned
_MAX_MODE_TILE = 1024  # bound per-step block size / unrolled IR


def _round_up(x, m):
    return (x + m - 1) // m * m


@functools.lru_cache(maxsize=None)
def _vmem_physical_bytes():
    """Per-core physical VMEM (128 MiB v5e/v6e, 64 MiB v7x)."""
    try:
        return int(pltpu.get_tpu_info().vmem_capacity_bytes)
    except Exception:
        return 64 * 1024 * 1024  # v7x per-core size: safe lower bound everywhere


def _vmem_limit_bytes():
    # Raise the scoped-VMEM limit (defaults: 16 MiB v5e / 32 MiB v6e, v7x) so the
    # double-buffered blocks sized by _block_budget_bytes() fit with headroom.
    return int(min(_vmem_physical_bytes() * 3 // 4, 96 * 1024 * 1024))


def _block_budget_bytes():
    # Per-copy block footprint (x + w + out); x2 for double buffering stays
    # within half of physical VMEM, well under the raised scoped limit.
    return _vmem_physical_bytes() // 4


# ---------------------------------------------------------------------------
# MXU path: fused mode-batched complex matmul over input channels.
# ---------------------------------------------------------------------------
def _spectral_mul_mxu_kernel(x_ref, w_ref, o_ref, *, modes_last):
    """One (corner, mode-tile) block.

    x_ref: (MT, 2B, Cin)   rows [0:B] = Re(x_ft), rows [B:2B] = Im(x_ft)
    w_ref: (MT, Cin, 2Co)  cols [0:Co] = Re(w),   cols [Co:2Co] = Im(w)
    o_ref: (2, B, Co, MT)  if modes_last (lane-dense stores, final layout)
           (2, MT, B, Co)  otherwise (fallback layout)
    """
    mt = x_ref.shape[0]
    if modes_last:
        b, co = o_ref.shape[1], o_ref.shape[2]
    else:
        b, co = o_ref.shape[2], o_ref.shape[3]

    # Static chunk loop: big DMA blocks, bounded einsum batch, 128-lane stores.
    for c0 in range(0, mt, _MODE_CHUNK):
        c1 = min(mt, c0 + _MODE_CHUNK)
        if modes_last:
            # One fused mode-batched MXU matmul (2B x Cin x 2Co), f32 accumulate.
            r = jnp.einsum("mbi,mio->mbo", x_ref[c0:c1], w_ref[c0:c1],
                           preferred_element_type=jnp.float32)       # (ch,2B,2Co)
            # Relayout to modes-last on the XLU (idle here), then combine the
            # four real quadrants with VPU add/sub on lane-dense tiles.
            rt = jnp.swapaxes(pltpu.einshape("mbo->bmo", r), 1, 2)   # (2B,2Co,ch)
            o_ref[0, :, :, c0:c1] = rt[:b, :co] - rt[b:, co:]
            o_ref[1, :, :, c0:c1] = rt[:b, co:] + rt[b:, :co]
        else:
            # Conservative fallback: slice the refs, 4 mode-batched matmuls,
            # modes-major store (wrapper transposes afterwards).
            xr, xi = x_ref[c0:c1, :b], x_ref[c0:c1, b:]
            wr, wi = w_ref[c0:c1, :, :co], w_ref[c0:c1, :, co:]
            mm = functools.partial(jnp.einsum, "mbi,mio->mbo",
                                   preferred_element_type=jnp.float32)
            o_ref[0, c0:c1] = mm(xr, wr) - mm(xi, wi)
            o_ref[1, c0:c1] = mm(xr, wi) + mm(xi, wr)


def _spectral_mul_mxu(x_ri, w_ri, *, mode_tile, modes_last):
    """x_ri: (C, Mp, 2B, Ci), w_ri: (C, Mp, Ci, 2Co) ->
       (C, 2, B, Co, Mp) f32 if modes_last else (C, 2, Mp, B, Co) f32."""
    c, mp, twob, ci = x_ri.shape
    co2 = w_ri.shape[3]
    b, co = twob // 2, co2 // 2
    assert mp % mode_tile == 0
    n_tiles = mp // mode_tile

    if modes_last:
        out_shape = jax.ShapeDtypeStruct((c, 2, b, co, mp), jnp.float32)
        out_spec = pl.BlockSpec((None, 2, b, co, mode_tile),
                                lambda ic, it: (ic, 0, 0, 0, it))
    else:
        out_shape = jax.ShapeDtypeStruct((c, 2, mp, b, co), jnp.float32)
        out_spec = pl.BlockSpec((None, 2, mode_tile, b, co),
                                lambda ic, it: (ic, 0, it, 0, 0))

    flops = 8 * c * mp * b * ci * co
    bytes_accessed = (x_ri.size * x_ri.dtype.itemsize
                      + w_ri.size * w_ri.dtype.itemsize
                      + c * 2 * b * co * mp * 4)

    grid_spec = pltpu.PrefetchScalarGridSpec(
        num_scalar_prefetch=0,
        # Corner kept as its own parallel axis so v7x's 2 TensorCores split it.
        grid=(c, n_tiles),
        in_specs=[
            pl.BlockSpec((None, mode_tile, twob, ci), lambda ic, it: (ic, it, 0, 0)),
            pl.BlockSpec((None, mode_tile, ci, co2), lambda ic, it: (ic, it, 0, 0)),
        ],
        out_specs=out_spec,
    )
    return pl.pallas_call(
        functools.partial(_spectral_mul_mxu_kernel, modes_last=modes_last),
        out_shape=out_shape,
        grid_spec=grid_spec,
        compiler_params=pltpu.CompilerParams(
            dimension_semantics=("parallel", "parallel"),
            vmem_limit_bytes=_vmem_limit_bytes()),
        cost_estimate=pl.CostEstimate(flops=int(flops), transcendentals=0,
                                      bytes_accessed=int(bytes_accessed)),
    )(x_ri, w_ri)


@functools.lru_cache(maxsize=None)
def _modes_last_store_ok():
    """One-time probe: does the in-kernel modes-last relayout (einshape +
    swapaxes + quadrant combine) compile and produce correct values here?
    If not, fall back to the proven modes-major store + wrapper transpose."""
    try:
        c, mp, b, ci, co = 2, 2 * _MODE_CHUNK, 4, 8, 8
        kx, kw = jax.random.split(jax.random.PRNGKey(42))
        x = jax.random.normal(kx, (c, mp, 2 * b, ci), jnp.float32)
        w = jax.random.normal(kw, (c, mp, ci, 2 * co), jnp.float32)
        out = jax.block_until_ready(
            _spectral_mul_mxu(x, w, mode_tile=_MODE_CHUNK, modes_last=True))
        mm = functools.partial(jnp.einsum, "cmbi,cmio->cmbo",
                               precision=lax.Precision.HIGHEST)
        xr, xi = x[:, :, :b], x[:, :, b:]
        wr, wi = w[..., :co], w[..., co:]
        ref = jnp.stack([mm(xr, wr) - mm(xi, wi), mm(xr, wi) + mm(xi, wr)], 1)
        ref = jnp.moveaxis(ref, 2, 4)                       # (c, 2, b, co, mp)
        return bool(jnp.allclose(out, ref, rtol=2e-3, atol=2e-3))
    except Exception:
        return False


def _mxu_mode_tiling(m, b, ci, co, xw_itemsize):
    """Mode tile + padded mode count, sized from the real batch and VMEM."""
    per_mode = 2 * b * ci * xw_itemsize + ci * 2 * co * xw_itemsize + 2 * b * co * 4
    fit = max(1, _block_budget_bytes() // per_mode)
    if fit >= m and m <= _MAX_MODE_TILE:
        return m, m                                   # whole corner, no padding
    mp = _round_up(m, _MODE_CHUNK)
    mt = min(_MAX_MODE_TILE, mp,
             max(_MODE_CHUNK, fit // _MODE_CHUNK * _MODE_CHUNK))
    while mp % mt:
        mt -= _MODE_CHUNK
    return mt, mp


# ---------------------------------------------------------------------------
# VPU fallback: tiny channel counts; corners folded onto the lane axis,
# (Cin, B) folded onto the sublane axis for dense loads.
# ---------------------------------------------------------------------------
def _spectral_mul_vpu_kernel(x_ref, w_ref, o_ref, *, batch):
    """x_ref: (2, Cin*B, LT), w_ref: (2, Cin, Co, LT), o_ref: (2, Co, B, LT)."""
    ci = w_ref.shape[1]
    acc_r = jnp.zeros(o_ref.shape[1:], jnp.float32)
    acc_i = jnp.zeros(o_ref.shape[1:], jnp.float32)
    for i in range(ci):  # this path only runs for tiny channel counts
        xr = x_ref[0, i * batch:(i + 1) * batch, :]       # (B, LT)
        xi = x_ref[1, i * batch:(i + 1) * batch, :]
        wr = w_ref[0, i][:, None, :]                      # (Co, 1, LT)
        wi = w_ref[1, i][:, None, :]
        acc_r = acc_r + xr[None] * wr - xi[None] * wi
        acc_i = acc_i + xr[None] * wi + xi[None] * wr
    o_ref[0] = acc_r
    o_ref[1] = acc_i


def _spectral_mul_vpu(x_ri, w_ri, *, batch, lane_tile):
    """x_ri: (2, Ci*B, Lp), w_ri: (2, Ci, Co, Lp) -> (2, Co, B, Lp) f32."""
    _, cib, lp = x_ri.shape
    ci, co = w_ri.shape[1], w_ri.shape[2]
    assert lp % lane_tile == 0
    n_tiles = lp // lane_tile

    flops = 8 * lp * batch * ci * co
    bytes_accessed = 4 * (x_ri.size + w_ri.size + 2 * co * batch * lp)

    grid_spec = pltpu.PrefetchScalarGridSpec(
        num_scalar_prefetch=0,
        grid=(n_tiles,),
        in_specs=[
            pl.BlockSpec((2, cib, lane_tile), lambda t: (0, 0, t)),
            pl.BlockSpec((2, ci, co, lane_tile), lambda t: (0, 0, 0, t)),
        ],
        out_specs=pl.BlockSpec((2, co, batch, lane_tile), lambda t: (0, 0, 0, t)),
    )
    return pl.pallas_call(
        functools.partial(_spectral_mul_vpu_kernel, batch=batch),
        out_shape=jax.ShapeDtypeStruct((2, co, batch, lp), jnp.float32),
        grid_spec=grid_spec,
        compiler_params=pltpu.CompilerParams(
            dimension_semantics=("parallel",),
            vmem_limit_bytes=_vmem_limit_bytes()),
        cost_estimate=pl.CostEstimate(flops=int(flops), transcendentals=0,
                                      bytes_accessed=int(bytes_accessed)),
    )(x_ri, w_ri)


def _vpu_lane_tile(lp, b, ci, co):
    per_lane = 4 * (2 * ci * b + 2 * ci * co + 2 * co * b)
    lt = max(128, (_block_budget_bytes() // per_lane) // 128 * 128)
    lt = min(lt, 2048, lp)
    while lp % lt:
        lt -= 128
    return lt


# ---------------------------------------------------------------------------
# Module wrapper (matches the PyTorch SpectralConv2d forward semantics).
# ---------------------------------------------------------------------------
class SpectralConv2d:
    def __init__(self, in_channels, out_channels, modes1, modes2, key,
                 compute_dtype=jnp.bfloat16):
        self.in_channels = in_channels
        self.out_channels = out_channels
        self.modes1 = modes1
        self.modes2 = modes2
        self.scale = 1.0 / (in_channels * out_channels)

        k1, k2, k3, k4 = jax.random.split(key, 4)
        shp = (in_channels, out_channels, modes1, modes2)
        # torch.rand(..., dtype=cfloat) draws real & imag uniformly in [0, 1).
        self.weights1 = (self.scale * (
            jax.random.uniform(k1, shp, jnp.float32)
            + 1j * jax.random.uniform(k2, shp, jnp.float32))).astype(jnp.complex64)
        self.weights2 = (self.scale * (
            jax.random.uniform(k3, shp, jnp.float32)
            + 1j * jax.random.uniform(k4, shp, jnp.float32))).astype(jnp.complex64)

        m = modes1 * modes2
        # MXU path for realistic FNO channel counts, VPU MAC loop for tiny ones.
        self.use_mxu = min(in_channels, out_channels) >= 16
        # bf16 operands (f32 accumulation) on the MXU path only; the VPU path
        # stays f32 (no bf16 VALU on v5e).
        self.compute_dtype = jax.dtypes.canonicalize_dtype(
            compute_dtype if self.use_mxu else jnp.float32)

        # Precompute kernel-layout weight planes ONCE.
        w = jnp.stack([self.weights1, self.weights2], axis=0)
        w = w.reshape(2, in_channels, out_channels, m)              # (2,Ci,Co,M)
        if self.use_mxu:
            # (corner, M, Ci, [Re|Im]*Co) in the compute dtype.
            wk = jnp.moveaxis(w, 3, 1)                               # (2,M,Ci,Co)
            self.w_cat = jnp.concatenate(
                [wk.real, wk.imag], axis=-1).astype(self.compute_dtype)
        else:
            # (re/im, Ci, Co, Lp) with both corners folded on the lane axis.
            lp = _round_up(2 * m, 128)
            wv = jnp.transpose(w, (1, 2, 0, 3)).reshape(
                in_channels, out_channels, 2 * m)                    # (Ci,Co,2M)
            wv = jnp.stack([wv.real, wv.imag], axis=0)               # (2,Ci,Co,2M)
            self.w_vpu = jnp.pad(
                wv, ((0, 0), (0, 0), (0, 0), (0, lp - 2 * m))).astype(jnp.float32)
            self.lane_padded = lp

    # -- MXU branch ----------------------------------------------------------
    def _contract_mxu(self, xc, b):
        cin, cout = self.in_channels, self.out_channels
        m = self.modes1 * self.modes2
        mode_tile, mp = _mxu_mode_tiling(m, b, cin, cout, self.compute_dtype.itemsize)
        modes_last = _modes_last_store_ok()

        # x -> (corner, mode, [Re rows | Im rows], Cin) in the compute dtype.
        # TODO(synk): if profiling shows this transpose/concat un-fused, pass the
        # complex slab bitcast to f32 and de-interleave in-kernel instead.
        xt = jnp.transpose(xc, (0, 3, 1, 2))                          # (2,M,B,Ci)
        xk = jnp.concatenate([xt.real, xt.imag], axis=2).astype(self.compute_dtype)
        wk = self.w_cat
        if mp > m:
            pad = ((0, 0), (0, mp - m), (0, 0), (0, 0))
            xk = jnp.pad(xk, pad)
            wk = jnp.pad(wk, pad)

        o = _spectral_mul_mxu(xk, wk, mode_tile=mode_tile, modes_last=modes_last)
        if modes_last:   # (2, 2, B, Co, Mp): already the layout the scatter wants
            oc = (o[:, 0] + 1j * o[:, 1])[..., :m]                    # (2,B,Co,M)
        else:            # (2, 2, Mp, B, Co): fallback, one extra wrapper pass
            oc = jnp.moveaxis((o[:, 0] + 1j * o[:, 1])[:, :m], 1, 3)  # (2,B,Co,M)
        return oc

    # -- VPU branch ----------------------------------------------------------
    def _contract_vpu(self, xc, b):
        cin, cout = self.in_channels, self.out_channels
        m = self.modes1 * self.modes2
        lp = self.lane_padded
        lane_tile = _vpu_lane_tile(lp, b, cin, cout)

        xt = jnp.transpose(xc, (2, 1, 0, 3)).reshape(cin * b, 2 * m)  # rows i*B+b
        xv = jnp.stack([xt.real, xt.imag], axis=0).astype(jnp.float32)
        xv = jnp.pad(xv, ((0, 0), (0, 0), (0, lp - 2 * m)))           # (2,Ci*B,Lp)

        o = _spectral_mul_vpu(xv, self.w_vpu, batch=b, lane_tile=lane_tile)
        oc = (o[0] + 1j * o[1])[..., :2 * m]                          # (Co,B,2M)
        oc = jnp.transpose(oc.reshape(cout, b, 2, m), (2, 1, 0, 3))   # (2,B,Co,M)
        return oc

    def __call__(self, x):
        b, cin, h, w = x.shape
        m1, m2 = self.modes1, self.modes2
        m = m1 * m2
        cout = self.out_channels

        # TODO(synk): rfft2/irfft2 have no Pallas TPU primitive; plain JAX FFT.
        x_ft = jnp.fft.rfft2(x)                                       # (B,Ci,H,W//2+1)
        xc = jnp.stack([x_ft[:, :, :m1, :m2],
                        x_ft[:, :, -m1:, :m2]], axis=0).reshape(2, b, cin, m)

        if self.use_mxu:
            out_corners = self._contract_mxu(xc, b)                   # (2,B,Co,M)
        else:
            out_corners = self._contract_vpu(xc, b)

        out_corners = out_corners.reshape(2, b, cout, m1, m2)
        out_ft = jnp.zeros((b, cout, h, w // 2 + 1), jnp.complex64)
        out_ft = out_ft.at[:, :, :m1, :m2].set(out_corners[0])
        out_ft = out_ft.at[:, :, -m1:, :m2].set(out_corners[1])
        return jnp.fft.irfft2(out_ft, s=(h, w))                       # (B,Co,H,W) f32


def _reference_forward(x, layer):
    """Pure-JAX reference identical to the PyTorch module's forward."""
    b, _, h, w = x.shape
    m1, m2 = layer.modes1, layer.modes2
    cout = layer.out_channels
    hp = lax.Precision.HIGHEST
    x_ft = jnp.fft.rfft2(x)
    out_ft = jnp.zeros((b, cout, h, w // 2 + 1), jnp.complex64)
    out_ft = out_ft.at[:, :, :m1, :m2].set(
        jnp.einsum("bixy,ioxy->boxy", x_ft[:, :, :m1, :m2],
                   layer.weights1, precision=hp))
    out_ft = out_ft.at[:, :, -m1:, :m2].set(
        jnp.einsum("bixy,ioxy->boxy", x_ft[:, :, -m1:, :m2],
                   layer.weights2, precision=hp))
    return jnp.fft.irfft2(out_ft, s=(h, w))


if __name__ == "__main__":
    key = jax.random.PRNGKey(0)
    k_x, k_w, k_x2, k_w2 = jax.random.split(key, 4)

    # --- Test 1: tiny channels -> VPU path (f32) -----------------------------
    B, Cin, Cout, H, W = 2, 4, 4, 16, 16
    x = jax.random.normal(k_x, (B, Cin, H, W), dtype=jnp.float32)
    layer = SpectralConv2d(Cin, Cout, 4, 4, k_w)
    assert not layer.use_mxu
    y = jax.block_until_ready(layer(x))
    y_ref = _reference_forward(x, layer)
    assert y.shape == (B, Cout, H, W)
    assert jnp.allclose(y, y_ref, rtol=1e-4, atol=2e-5), \
        float(jnp.max(jnp.abs(y - y_ref)))

    # --- Test 2: realistic channels -> MXU path, f32 operands (tight check) --
    B2, C2, H2, W2 = 2, 32, 32, 32
    x2 = jax.random.normal(k_x2, (B2, C2, H2, W2), dtype=jnp.float32)
    layer_f32 = SpectralConv2d(C2, C2, 8, 8, k_w2, compute_dtype=jnp.float32)
    assert layer_f32.use_mxu
    y2 = jax.block_until_ready(layer_f32(x2))
    y2_ref = _reference_forward(x2, layer_f32)
    assert y2.shape == (B2, C2, H2, W2)
    assert jnp.allclose(y2, y2_ref, rtol=1e-3, atol=1e-4), \
        float(jnp.max(jnp.abs(y2 - y2_ref)))

    # --- Test 3: MXU path, default bf16 operands / f32 accumulation ----------
    layer_bf16 = SpectralConv2d(C2, C2, 8, 8, k_w2)   # same key -> same weights
    y3 = jax.block_until_ready(layer_bf16(x2))
    scale = float(jnp.max(jnp.abs(y2_ref)))
    rel_l2 = float(jnp.linalg.norm(y3 - y2_ref) / jnp.linalg.norm(y2_ref))
    assert rel_l2 < 2e-2, rel_l2
    assert float(jnp.max(jnp.abs(y3 - y2_ref))) < 5e-2 * scale + 1e-6

    print("KERNEL_OK")
</pallas_src>

<mosaic_0001>
module attributes {stable_mosaic.version = 11 : i64} {
  func.func @_spectral_mul_vpu_kernel(%arg0: i32, %arg1: memref<2x8x128xf32, #tpu.memory_space<vmem>>, %arg2: memref<2x4x4x128xf32, #tpu.memory_space<vmem>>, %arg3: memref<2x4x2x128xf32, #tpu.memory_space<vmem>>) attributes {dimension_semantics = [#tpu.dimension_semantics<parallel>], iteration_bounds = array<i64: 1>, scalar_prefetch = 0 : i64, scratch_operands = 0 : i64, tpu.core_type = #tpu.core_type<tc>, window_params = [{transform_indices = @transform_0, window_bounds = array<i64: 2, 8, 128>}, {transform_indices = @transform_1, window_bounds = array<i64: 2, 4, 4, 128>}, {transform_indices = @transform_2, window_bounds = array<i64: 2, 4, 2, 128>}]} {
    %cst = arith.constant 0.000000e+00 : f32
    %0 = vector.broadcast %cst : f32 to vector<4x2x128xf32>
    %cst_0 = arith.constant 0.000000e+00 : f32
    %1 = vector.broadcast %cst_0 : f32 to vector<4x2x128xf32>
    %c0 = arith.constant 0 : index
    %c0_1 = arith.constant 0 : index
    %c0_2 = arith.constant 0 : index
    %2 = vector.load %arg1[%c0, %c0_1, %c0_2] : memref<2x8x128xf32, #tpu.memory_space<vmem>>, vector<1x2x128xf32>
    %3 = vector.shape_cast %2 : vector<1x2x128xf32> to vector<2x128xf32>
    %c1 = arith.constant 1 : index
    %c0_3 = arith.constant 0 : index
    %c0_4 = arith.constant 0 : index
    %4 = vector.load %arg1[%c1, %c0_3, %c0_4] : memref<2x8x128xf32, #tpu.memory_space<vmem>>, vector<1x2x128xf32>
    %5 = vector.shape_cast %4 : vector<1x2x128xf32> to vector<2x128xf32>
    %c0_5 = arith.constant 0 : index
    %c0_6 = arith.constant 0 : index
    %c0_7 = arith.constant 0 : index
    %c0_8 = arith.constant 0 : index
    %6 = vector.load %arg2[%c0_5, %c0_6, %c0_7, %c0_8] : memref<2x4x4x128xf32, #tpu.memory_space<vmem>>, vector<1x1x4x128xf32>
    %7 = vector.shape_cast %6 : vector<1x1x4x128xf32> to vector<4x128xf32>
    %8 = vector.shape_cast %7 : vector<4x128xf32> to vector<4x1x128xf32>
    %c1_9 = arith.constant 1 : index
    %c0_10 = arith.constant 0 : index
    %c0_11 = arith.constant 0 : index
    %c0_12 = arith.constant 0 : index
    %9 = vector.load %arg2[%c1_9, %c0_10, %c0_11, %c0_12] : memref<2x4x4x128xf32, #tpu.memory_space<vmem>>, vector<1x1x4x128xf32>
    %10 = vector.shape_cast %9 : vector<1x1x4x128xf32> to vector<4x128xf32>
    %11 = vector.shape_cast %10 : vector<4x128xf32> to vector<4x1x128xf32>
    %12 = vector.shape_cast %3 : vector<2x128xf32> to vector<1x2x128xf32>
    %13 = vector.broadcast %12 : vector<1x2x128xf32> to vector<4x2x128xf32>
    %14 = vector.broadcast %8 : vector<4x1x128xf32> to vector<4x2x128xf32>
    %15 = arith.mulf %13, %14 : vector<4x2x128xf32>
    %16 = arith.addf %0, %15 : vector<4x2x128xf32>
    %17 = vector.shape_cast %5 : vector<2x128xf32> to vector<1x2x128xf32>
    %18 = vector.broadcast %17 : vector<1x2x128xf32> to vector<4x2x128xf32>
    %19 = vector.broadcast %11 : vector<4x1x128xf32> to vector<4x2x128xf32>
    %20 = arith.mulf %18, %19 : vector<4x2x128xf32>
    %21 = arith.subf %16, %20 : vector<4x2x128xf32>
    %22 = vector.shape_cast %3 : vector<2x128xf32> to vector<1x2x128xf32>
    %23 = vector.broadcast %22 : vector<1x2x128xf32> to vector<4x2x128xf32>
    %24 = vector.broadcast %11 : vector<4x1x128xf32> to vector<4x2x128xf32>
    %25 = arith.mulf %23, %24 : vector<4x2x128xf32>
    %26 = arith.addf %1, %25 : vector<4x2x128xf32>
    %27 = vector.shape_cast %5 : vector<2x128xf32> to vector<1x2x128xf32>
    %28 = vector.broadcast %27 : vector<1x2x128xf32> to vector<4x2x128xf32>
    %29 = vector.broadcast %8 : vector<4x1x128xf32> to vector<4x2x128xf32>
    %30 = arith.mulf %28, %29 : vector<4x2x128xf32>
    %31 = arith.addf %26, %30 : vector<4x2x128xf32>
    %c0_13 = arith.constant 0 : index
    %c2 = arith.constant 2 : index
    %c0_14 = arith.constant 0 : index
    %32 = vector.load %arg1[%c0_13, %c2, %c0_14] : memref<2x8x128xf32, #tpu.memory_space<vmem>>, vector<1x2x128xf32>
    %33 = vector.shape_cast %32 : vector<1x2x128xf32> to vector<2x128xf32>
    %c1_15 = arith.constant 1 : index
    %c2_16 = arith.constant 2 : index
    %c0_17 = arith.constant 0 : index
    %34 = vector.load %arg1[%c1_15, %c2_16, %c0_17] : memref<2x8x128xf32, #tpu.memory_space<vmem>>, vector<1x2x128xf32>
    %35 = vector.shape_cast %34 : vector<1x2x128xf32> to vector<2x128xf32>
    %c0_18 = arith.constant 0 : index
    %c1_19 = arith.constant 1 : index
    %c0_20 = arith.constant 0 : index
    %c0_21 = arith.constant 0 : index
    %36 = vector.load %arg2[%c0_18, %c1_19, %c0_20, %c0_21] : memref<2x4x4x128xf32, #tpu.memory_space<vmem>>, vector<1x1x4x128xf32>
    %37 = vector.shape_cast %36 : vector<1x1x4x128xf32> to vector<4x128xf32>
    %38 = vector.shape_cast %37 : vector<4x128xf32> to vector<4x1x128xf32>
    %c1_22 = arith.constant 1 : index
    %c1_23 = arith.constant 1 : index
    %c0_24 = arith.constant 0 : index
    %c0_25 = arith.constant 0 : index
    %39 = vector.load %arg2[%c1_22, %c1_23, %c0_24, %c0_25] : memref<2x4x4x128xf32, #tpu.memory_space<vmem>>, vector<1x1x4x128xf32>
    %40 = vector.shape_cast %39 : vector<1x1x4x128xf32> to vector<4x128xf32>
    %41 = vector.shape_cast %40 : vector<4x128xf32> to vector<4x1x128xf32>
    %42 = vector.shape_cast %33 : vector<2x128xf32> to vector<1x2x128xf32>
    %43 = vector.broadcast %42 : vector<1x2x128xf32> to vector<4x2x128xf32>
    %44 = vector.broadcast %38 : vector<4x1x128xf32> to vector<4x2x128xf32>
    %45 = arith.mulf %43, %44 : vector<4x2x128xf32>
    %46 = arith.addf %21, %45 : vector<4x2x128xf32>
    %47 = vector.shape_cast %35 : vector<2x128xf32> to vector<1x2x128xf32>
    %48 = vector.broadcast %47 : vector<1x2x128xf32> to vector<4x2x128xf32>
    %49 = vector.broadcast %41 : vector<4x1x128xf32> to vector<4x2x128xf32>
    %50 = arith.mulf %48, %49 : vector<4x2x128xf32>
    %51 = arith.subf %46, %50 : vector<4x2x128xf32>
    %52 = vector.shape_cast %33 : vector<2x128xf32> to vector<1x2x128xf32>
    %53 = vector.broadcast %52 : vector<1x2x128xf32> to vector<4x2x128xf32>
    %54 = vector.broadcast %41 : vector<4x1x128xf32> to vector<4x2x128xf32>
    %55 = arith.mulf %53, %54 : vector<4x2x128xf32>
    %56 = arith.addf %31, %55 : vector<4x2x128xf32>
    %57 = vector.shape_cast %35 : vector<2x128xf32> to vector<1x2x128xf32>
    %58 = vector.broadcast %57 : vector<1x2x128xf32> to vector<4x2x128xf32>
    %59 = vector.broadcast %38 : vector<4x1x128xf32> to vector<4x2x128xf32>
    %60 = arith.mulf %58, %59 : vector<4x2x128xf32>
    %61 = arith.addf %56, %60 : vector<4x2x128xf32>
    %c0_26 = arith.constant 0 : index
    %c4 = arith.constant 4 : index
    %c0_27 = arith.constant 0 : index
    %62 = vector.load %arg1[%c0_26, %c4, %c0_27] : memref<2x8x128xf32, #tpu.memory_space<vmem>>, vector<1x2x128xf32>
    %63 = vector.shape_cast %62 : vector<1x2x128xf32> to vector<2x128xf32>
    %c1_28 = arith.constant 1 : index
    %c4_29 = arith.constant 4 : index
    %c0_30 = arith.constant 0 : index
    %64 = vector.load %arg1[%c1_28, %c4_29, %c0_30] : memref<2x8x128xf32, #tpu.memory_space<vmem>>, vector<1x2x128xf32>
    %65 = vector.shape_cast %64 : vector<1x2x128xf32> to vector<2x128xf32>
    %c0_31 = arith.constant 0 : index
    %c2_32 = arith.constant 2 : index
    %c0_33 = arith.constant 0 : index
    %c0_34 = arith.constant 0 : index
    %66 = vector.load %arg2[%c0_31, %c2_32, %c0_33, %c0_34] : memref<2x4x4x128xf32, #tpu.memory_space<vmem>>, vector<1x1x4x128xf32>
    %67 = vector.shape_cast %66 : vector<1x1x4x128xf32> to vector<4x128xf32>
    %68 = vector.shape_cast %67 : vector<4x128xf32> to vector<4x1x128xf32>
    %c1_35 = arith.constant 1 : index
    %c2_36 = arith.constant 2 : index
    %c0_37 = arith.constant 0 : index
    %c0_38 = arith.constant 0 : index
    %69 = vector.load %arg2[%c1_35, %c2_36, %c0_37, %c0_38] : memref<2x4x4x128xf32, #tpu.memory_space<vmem>>, vector<1x1x4x128xf32>
    %70 = vector.shape_cast %69 : vector<1x1x4x128xf32> to vector<4x128xf32>
    %71 = vector.shape_cast %70 : vector<4x128xf32> to vector<4x1x128xf32>
    %72 = vector.shape_cast %63 : vector<2x128xf32> to vector<1x2x128xf32>
    %73 = vector.broadcast %72 : vector<1x2x128xf32> to vector<4x2x128xf32>
    %74 = vector.broadcast %68 : vector<4x1x128xf32> to vector<4x2x128xf32>
    %75 = arith.mulf %73, %74 : vector<4x2x128xf32>
    %76 = arith.addf %51, %75 : vector<4x2x128xf32>
    %77 = vector.shape_cast %65 : vector<2x128xf32> to vector<1x2x128xf32>
    %78 = vector.broadcast %77 : vector<1x2x128xf32> to vector<4x2x128xf32>
    %79 = vector.broadcast %71 : vector<4x1x128xf32> to vector<4x2x128xf32>
    %80 = arith.mulf %78, %79 : vector<4x2x128xf32>
    %81 = arith.subf %76, %80 : vector<4x2x128xf32>
    %82 = vector.shape_cast %63 : vector<2x128xf32> to vector<1x2x128xf32>
    %83 = vector.broadcast %82 : vector<1x2x128xf32> to vector<4x2x128xf32>
    %84 = vector.broadcast %71 : vector<4x1x128xf32> to vector<4x2x128xf32>
    %85 = arith.mulf %83, %84 : vector<4x2x128xf32>
    %86 = arith.addf %61, %85 : vector<4x2x128xf32>
    %87 = vector.shape_cast %65 : vector<2x128xf32> to vector<1x2x128xf32>
    %88 = vector.broadcast %87 : vector<1x2x128xf32> to vector<4x2x128xf32>
    %89 = vector.broadcast %68 : vector<4x1x128xf32> to vector<4x2x128xf32>
    %90 = arith.mulf %88, %89 : vector<4x2x128xf32>
    %91 = arith.addf %86, %90 : vector<4x2x128xf32>
    %c0_39 = arith.constant 0 : index
    %c6 = arith.constant 6 : index
    %c0_40 = arith.constant 0 : index
    %92 = vector.load %arg1[%c0_39, %c6, %c0_40] : memref<2x8x128xf32, #tpu.memory_space<vmem>>, vector<1x2x128xf32>
    %93 = vector.shape_cast %92 : vector<1x2x128xf32> to vector<2x128xf32>
    %c1_41 = arith.constant 1 : index
    %c6_42 = arith.constant 6 : index
    %c0_43 = arith.constant 0 : index
    %94 = vector.load %arg1[%c1_41, %c6_42, %c0_43] : memref<2x8x128xf32, #tpu.memory_space<vmem>>, vector<1x2x128xf32>
    %95 = vector.shape_cast %94 : vector<1x2x128xf32> to vector<2x128xf32>
    %c0_44 = arith.constant 0 : index
    %c3 = arith.constant 3 : index
    %c0_45 = arith.constant 0 : index
    %c0_46 = arith.constant 0 : index
    %96 = vector.load %arg2[%c0_44, %c3, %c0_45, %c0_46] : memref<2x4x4x128xf32, #tpu.memory_space<vmem>>, vector<1x1x4x128xf32>
    %97 = vector.shape_cast %96 : vector<1x1x4x128xf32> to vector<4x128xf32>
    %98 = vector.shape_cast %97 : vector<4x128xf32> to vector<4x1x128xf32>
    %c1_47 = arith.constant 1 : index
    %c3_48 = arith.constant 3 : index
    %c0_49 = arith.constant 0 : index
    %c0_50 = arith.constant 0 : index
    %99 = vector.load %arg2[%c1_47, %c3_48, %c0_49, %c0_50] : memref<2x4x4x128xf32, #tpu.memory_space<vmem>>, vector<1x1x4x128xf32>
    %100 = vector.shape_cast %99 : vector<1x1x4x128xf32> to vector<4x128xf32>
    %101 = vector.shape_cast %100 : vector<4x128xf32> to vector<4x1x128xf32>
    %102 = vector.shape_cast %93 : vector<2x128xf32> to vector<1x2x128xf32>
    %103 = vector.broadcast %102 : vector<1x2x128xf32> to vector<4x2x128xf32>
    %104 = vector.broadcast %98 : vector<4x1x128xf32> to vector<4x2x128xf32>
    %105 = arith.mulf %103, %104 : vector<4x2x128xf32>
    %106 = arith.addf %81, %105 : vector<4x2x128xf32>
    %107 = vector.shape_cast %95 : vector<2x128xf32> to vector<1x2x128xf32>
    %108 = vector.broadcast %107 : vector<1x2x128xf32> to vector<4x2x128xf32>
    %109 = vector.broadcast %101 : vector<4x1x128xf32> to vector<4x2x128xf32>
    %110 = arith.mulf %108, %109 : vector<4x2x128xf32>
    %111 = arith.subf %106, %110 : vector<4x2x128xf32>
    %112 = vector.shape_cast %93 : vector<2x128xf32> to vector<1x2x128xf32>
    %113 = vector.broadcast %112 : vector<1x2x128xf32> to vector<4x2x128xf32>
    %114 = vector.broadcast %101 : vector<4x1x128xf32> to vector<4x2x128xf32>
    %115 = arith.mulf %113, %114 : vector<4x2x128xf32>
    %116 = arith.addf %91, %115 : vector<4x2x128xf32>
    %117 = vector.shape_cast %95 : vector<2x128xf32> to vector<1x2x128xf32>
    %118 = vector.broadcast %117 : vector<1x2x128xf32> to vector<4x2x128xf32>
    %119 = vector.broadcast %98 : vector<4x1x128xf32> to vector<4x2x128xf32>
    %120 = arith.mulf %118, %119 : vector<4x2x128xf32>
    %121 = arith.addf %116, %120 : vector<4x2x128xf32>
    %c0_51 = arith.constant 0 : index
    %c0_52 = arith.constant 0 : index
    %c0_53 = arith.constant 0 : index
    %c0_54 = arith.constant 0 : index
    %122 = vector.load %arg3[%c0_51, %c0_52, %c0_53, %c0_54] : memref<2x4x2x128xf32, #tpu.memory_space<vmem>>, vector<1x4x2x128xf32>
    %123 = vector.shape_cast %122 : vector<1x4x2x128xf32> to vector<4x2x128xf32>
    %124 = vector.shape_cast %111 : vector<4x2x128xf32> to vector<1x4x2x128xf32>
    tpu.vector_store %arg3[%c0_51, %c0_52, %c0_53, %c0_54], %124 {strides = array<i32>} : memref<2x4x2x128xf32, #tpu.memory_space<vmem>>, vector<1x4x2x128xf32>,
    %c1_55 = arith.constant 1 : index
    %c0_56 = arith.constant 0 : index
    %c0_57 = arith.constant 0 : index
    %c0_58 = arith.constant 0 : index
    %125 = vector.load %arg3[%c1_55, %c0_56, %c0_57, %c0_58] : memref<2x4x2x128xf32, #tpu.memory_space<vmem>>, vector<1x4x2x128xf32>
    %126 = vector.shape_cast %125 : vector<1x4x2x128xf32> to vector<4x2x128xf32>
    %127 = vector.shape_cast %121 : vector<4x2x128xf32> to vector<1x4x2x128xf32>
    tpu.vector_store %arg3[%c1_55, %c0_56, %c0_57, %c0_58], %127 {strides = array<i32>} : memref<2x4x2x128xf32, #tpu.memory_space<vmem>>, vector<1x4x2x128xf32>,
    return
  }
  func.func @transform_0(%arg0: i32) -> (i32, i32, i32) {
    %c0_i32 = arith.constant 0 : i32
    %c0_i32_0 = arith.constant 0 : i32
    %c0_i32_1 = arith.constant 0 : i32
    return %c0_i32, %c0_i32_0, %arg0 : i32, i32, i32
  }
  func.func @transform_1(%arg0: i32) -> (i32, i32, i32, i32) {
    %c0_i32 = arith.constant 0 : i32
    %c0_i32_0 = arith.constant 0 : i32
    %c0_i32_1 = arith.constant 0 : i32
    %c0_i32_2 = arith.constant 0 : i32
    return %c0_i32, %c0_i32_0, %c0_i32_1, %arg0 : i32, i32, i32, i32
  }
  func.func @transform_2(%arg0: i32) -> (i32, i32, i32, i32) {
    %c0_i32 = arith.constant 0 : i32
    %c0_i32_0 = arith.constant 0 : i32
    %c0_i32_1 = arith.constant 0 : i32
    %c0_i32_2 = arith.constant 0 : i32
    return %c0_i32, %c0_i32_0, %c0_i32_1, %arg0 : i32, i32, i32, i32
  }
}

</mosaic_0001>

<llo_original>
// kernel: tpu_custom_call.1
$region0: #{tpu_custom_call.1}
  #allocation0 [shape = 'u32[]', space=smem, size = 0x4, offset = 0x4, fixed_abs, tag = 'smem constant byte address 0x4 - core index']
  #allocation1 [shape = 'u32[72,128]{1,0:T(1,128)}', space=vmem, size = 0x9000, scoped, tag = 'internal scratch']
  %s0 = inlined_call_operand.hbm [shape: f32[2,8,128], index: 0, kind: input, shape index: {}]
  %s1 = inlined_call_operand.hbm [shape: f32[2,4,4,128], index: 1, kind: input, shape index: {}]
  %s2 = inlined_call_operand.hbm [shape: f32[2,4,2,128], index: 2, kind: output, shape index: {}]
  %s3 = sld [smem:[#allocation0]]
  $region26: #{tpu_custom_call.1} parent=0
    _
  %s5 = ssub.s32 1, %s3
  %s6 = scalar_select 0, %s5, %s3
  $region1: #{tpu_custom_call.1} parent=0
    #allocation2 [shape = 'u8[8192]{0}', space=vmem, size = 0x2000, scoped, tag = 'input window, operand 0, single buffered']
    #allocation3 [shape = 's32[1]{0}', space=sflag, size = 0x4, scoped, tag = 'scoped memory for tpu_custom_call.1']
    #allocation4 [shape = 's32[1]{0}', space=sflag, size = 0x4, scoped, tag = 'scoped memory for tpu_custom_call.1']
    #allocation5 [shape = 'u8[16384]{0}', space=vmem, size = 0x4000, scoped, tag = 'input window, operand 1, single buffered']
    #allocation6 [shape = 's32[1]{0}', space=sflag, size = 0x4, scoped, tag = 'scoped memory for tpu_custom_call.1']
    #allocation7 [shape = 'u8[8192]{0}', space=vmem, size = 0x2000, scoped, tag = 'output window, operand 0, single buffered']
    %7 = vsyncpa [#allocation3], 0
    %8 = vsyncpa [#allocation6], 0
    %9 = vsyncpa [#allocation4], 0
    // Predicated region
    $region2: #{tpu_custom_call.1} parent=1 // pred_check
      _
    $region3: #{tpu_custom_call.1} parent=1 // pred_check_branch
      %11 = sbr.rel (0) target = $region5
    $region4: #{tpu_custom_call.1} parent=1 // pred_region
      %13 = vsyncadd [#allocation3], 0
      %s14 = sshll.u32 %s0, 4
      %s15 = int_to_ptr.hbm [resolvable:$true] %s14
      %s16 = sshll.u32 [#allocation2], 4
      %s17 = int_to_ptr.vmem [resolvable:$true] %s16
      %22 = dma.hbm_to_vmem [thread:$0]  %s15, 256, %s17, [#allocation3], 128, 128, 8
    $region5: #{tpu_custom_call.1} parent=1 // pred_fallthru
      _
    // Predicated region
    $region6: #{tpu_custom_call.1} parent=1 // pred_check
      _
    $region7: #{tpu_custom_call.1} parent=1 // pred_check_branch
      %24 = sbr.rel (0) target = $region9
    $region8: #{tpu_custom_call.1} parent=1 // pred_region
      %26 = vsyncadd [#allocation6], 0
      %s27 = sshll.u32 %s1, 4
      %s28 = int_to_ptr.hbm [resolvable:$true] %s27
      %s29 = sshll.u32 [#allocation5], 4
      %s30 = int_to_ptr.vmem [resolvable:$true] %s29
      %35 = dma.hbm_to_vmem [thread:$0]  %s28, 512, %s30, [#allocation6], 64, 64, 4
    $region9: #{tpu_custom_call.1} parent=1 // pred_fallthru
      _
    // Predicated region
    $region10: #{tpu_custom_call.1} parent=1 // pred_check
      _
    $region11: #{tpu_custom_call.1} parent=1 // pred_check_branch
      %37 = sbr.rel (0) target = $region13
    $region12: #{tpu_custom_call.1} parent=1 // pred_region
      %39 = dma.done [#allocation3], 256
    $region13: #{tpu_custom_call.1} parent=1 // pred_fallthru
      _
    // Predicated region
    $region14: #{tpu_custom_call.1} parent=1 // pred_check
      _
    $region15: #{tpu_custom_call.1} parent=1 // pred_check_branch
      %41 = sbr.rel (0) target = $region17
    $region16: #{tpu_custom_call.1} parent=1 // pred_region
      %43 = dma.done [#allocation6], 512
    $region17: #{tpu_custom_call.1} parent=1 // pred_fallthru
      _
    %v44 = vld [vmem:[#allocation2] sm:$0x3]
    %s45 = scalar_lea.vmem [#allocation2], 8
    %v46 = vld [vmem:[%s45] sm:$0x3]
    %v47 = vld [vmem:[#allocation5] sm:$0xf]
    %v49 = vrot.slane %v47, 1
    %v50 = vrot.slane %v47, 2
    %v51 = vrot.slane %v47, 3
    %s52 = scalar_lea.vmem [#allocation5], 16
    %v53 = vld [vmem:[%s52] sm:$0xf]
    %v55 = vrot.slane %v53, 1
    %v56 = vrot.slane %v53, 2
    %v57 = vrot.slane %v53, 3
    %v58 = vperm.slane %v47, 0
    %v59 = vperm.slane %v49, 0
    %v60 = vperm.slane %v50, 0
    %v61 = vperm.slane %v51, 0
    %v66 = vmul.f32 %v44, %v58
    %v67 = vmul.f32 %v44, %v59
    %v68 = vmul.f32 %v44, %v60
    %v69 = vmul.f32 %v44, %v61
    %v70 = vadd.f32 %v66, 0.0
    %v71 = vadd.f32 %v67, 0.0
    %v72 = vadd.f32 %v68, 0.0
    %v73 = vadd.f32 %v69, 0.0
    %v74 = vperm.slane %v53, 0
    %v75 = vperm.slane %v55, 0
    %v76 = vperm.slane %v56, 0
    %v77 = vperm.slane %v57, 0
    %v82 = vmul.f32 %v46, %v74
    %v83 = vmul.f32 %v46, %v75
    %v84 = vmul.f32 %v46, %v76
    %v85 = vmul.f32 %v46, %v77
    %v86 = vsub.f32 %v70, %v82
    %v87 = vsub.f32 %v71, %v83
    %v88 = vsub.f32 %v72, %v84
    %v89 = vsub.f32 %v73, %v85
    %v90 = vmul.f32 %v44, %v74
    %v91 = vmul.f32 %v44, %v75
    %v92 = vmul.f32 %v44, %v76
    %v93 = vmul.f32 %v44, %v77
    %v94 = vadd.f32 %v90, 0.0
    %v95 = vadd.f32 %v91, 0.0
    %v96 = vadd.f32 %v92, 0.0
    %v97 = vadd.f32 %v93, 0.0
    %v98 = vmul.f32 %v46, %v58
    %v99 = vmul.f32 %v46, %v59
    %v100 = vmul.f32 %v46, %v60
    %v101 = vmul.f32 %v46, %v61
    %v102 = vadd.f32 %v94, %v98
    %v103 = vadd.f32 %v95, %v99
    %v104 = vadd.f32 %v96, %v100
    %v105 = vadd.f32 %v97, %v101
    %v106 = vld [vmem:[#allocation2 + $0x2] sm:$0x3]
    %v107 = vld [vmem:[%s45 + $0x2] sm:$0x3]
    %s108 = scalar_lea.vmem [#allocation5], 4
    %v109 = vld [vmem:[%s108] sm:$0xf]
    %v111 = vrot.slane %v109, 1
    %v112 = vrot.slane %v109, 2
    %v113 = vrot.slane %v109, 3
    %s114 = scalar_lea.vmem [#allocation5], 20
    %v115 = vld [vmem:[%s114] sm:$0xf]
    %v117 = vrot.slane %v115, 1
    %v118 = vrot.slane %v115, 2
    %v119 = vrot.slane %v115, 3
    %v120 = vperm.slane %v109, 0
    %v121 = vperm.slane %v111, 0
    %v122 = vperm.slane %v112, 0
    %v123 = vperm.slane %v113, 0
    %v128 = vmul.f32 %v106, %v120
    %v129 = vmul.f32 %v106, %v121
    %v130 = vmul.f32 %v106, %v122
    %v131 = vmul.f32 %v106, %v123
    %v132 = vadd.f32 %v86, %v128
    %v133 = vadd.f32 %v87, %v129
    %v134 = vadd.f32 %v88, %v130
    %v135 = vadd.f32 %v89, %v131
    %v136 = vperm.slane %v115, 0
    %v137 = vperm.slane %v117, 0
    %v138 = vperm.slane %v118, 0
    %v139 = vperm.slane %v119, 0
    %v144 = vmul.f32 %v107, %v136
    %v145 = vmul.f32 %v107, %v137
    %v146 = vmul.f32 %v107, %v138
    %v147 = vmul.f32 %v107, %v139
    %v148 = vsub.f32 %v132, %v144
    %v149 = vsub.f32 %v133, %v145
    %v150 = vsub.f32 %v134, %v146
    %v151 = vsub.f32 %v135, %v147
    %v152 = vmul.f32 %v106, %v136
    %v153 = vmul.f32 %v106, %v137
    %v154 = vmul.f32 %v106, %v138
    %v155 = vmul.f32 %v106, %v139
    %v156 = vadd.f32 %v102, %v152
    %v157 = vadd.f32 %v103, %v153
    %v158 = vadd.f32 %v104, %v154
    %v159 = vadd.f32 %v105, %v155
    %v160 = vmul.f32 %v107, %v120
    %v161 = vmul.f32 %v107, %v121
    %v162 = vmul.f32 %v107, %v122
    %v163 = vmul.f32 %v107, %v123
    %v164 = vadd.f32 %v156, %v160
    %v165 = vadd.f32 %v157, %v161
    %v166 = vadd.f32 %v158, %v162
    %v167 = vadd.f32 %v159, %v163
    %v168 = vld [vmem:[#allocation2 + $0x4] sm:$0x3]
    %v169 = vld [vmem:[%s45 + $0x4] sm:$0x3]
    %s170 = scalar_lea.vmem [#allocation5], 8
    %v171 = vld [vmem:[%s170] sm:$0xf]
    %v173 = vrot.slane %v171, 1
    %v174 = vrot.slane %v171, 2
    %v175 = vrot.slane %v171, 3
    %s176 = scalar_lea.vmem [#allocation5], 24
    %v177 = vld [vmem:[%s176] sm:$0xf]
    %v179 = vrot.slane %v177, 1
    %v180 = vrot.slane %v177, 2
    %v181 = vrot.slane %v177, 3
    %v182 = vperm.slane %v171, 0
    %v183 = vperm.slane %v173, 0
    %v184 = vperm.slane %v174, 0
    %v185 = vperm.slane %v175, 0
    %v190 = vmul.f32 %v168, %v182
    %v191 = vmul.f32 %v168, %v183
    %v192 = vmul.f32 %v168, %v184
    %v193 = vmul.f32 %v168, %v185
    %v194 = vadd.f32 %v148, %v190
    %v195 = vadd.f32 %v149, %v191
    %v196 = vadd.f32 %v150, %v192
    %v197 = vadd.f32 %v151, %v193
    %v198 = vperm.slane %v177, 0
    %v199 = vperm.slane %v179, 0
    %v200 = vperm.slane %v180, 0
    %v201 = vperm.slane %v181, 0
    %v206 = vmul.f32 %v169, %v198
    %v207 = vmul.f32 %v169, %v199
    %v208 = vmul.f32 %v169, %v200
    %v209 = vmul.f32 %v169, %v201
    %v210 = vsub.f32 %v194, %v206
    %v211 = vsub.f32 %v195, %v207
    %v212 = vsub.f32 %v196, %v208
    %v213 = vsub.f32 %v197, %v209
    %v214 = vmul.f32 %v168, %v198
    %v215 = vmul.f32 %v168, %v199
    %v216 = vmul.f32 %v168, %v200
    %v217 = vmul.f32 %v168, %v201
    %v218 = vadd.f32 %v164, %v214
    %v219 = vadd.f32 %v165, %v215
    %v220 = vadd.f32 %v166, %v216
    %v221 = vadd.f32 %v167, %v217
    %v222 = vmul.f32 %v169, %v182
    %v223 = vmul.f32 %v169, %v183
    %v224 = vmul.f32 %v169, %v184
    %v225 = vmul.f32 %v169, %v185
    %v226 = vadd.f32 %v218, %v222
    %v227 = vadd.f32 %v219, %v223
    %v228 = vadd.f32 %v220, %v224
    %v229 = vadd.f32 %v221, %v225
    %v230 = vld [vmem:[#allocation2 + $0x6] sm:$0x3]
    %v231 = vld [vmem:[%s45 + $0x6] sm:$0x3]
    %s232 = scalar_lea.vmem [#allocation5], 12
    %v233 = vld [vmem:[%s232] sm:$0xf]
    %v235 = vrot.slane %v233, 1
    %v236 = vrot.slane %v233, 2
    %v237 = vrot.slane %v233, 3
    %s238 = scalar_lea.vmem [#allocation5], 28
    %v239 = vld [vmem:[%s238] sm:$0xf]
    %v241 = vrot.slane %v239, 1
    %v242 = vrot.slane %v239, 2
    %v243 = vrot.slane %v239, 3
    %v244 = vperm.slane %v233, 0
    %v245 = vperm.slane %v235, 0
    %v246 = vperm.slane %v236, 0
    %v247 = vperm.slane %v237, 0
    %v252 = vmul.f32 %v230, %v244
    %v253 = vmul.f32 %v230, %v245
    %v254 = vmul.f32 %v230, %v246
    %v255 = vmul.f32 %v230, %v247
    %v256 = vadd.f32 %v210, %v252
    %v257 = vadd.f32 %v211, %v253
    %v258 = vadd.f32 %v212, %v254
    %v259 = vadd.f32 %v213, %v255
    %v260 = vperm.slane %v239, 0
    %v261 = vperm.slane %v241, 0
    %v262 = vperm.slane %v242, 0
    %v263 = vperm.slane %v243, 0
    %v268 = vmul.f32 %v231, %v260
    %v269 = vmul.f32 %v231, %v261
    %v270 = vmul.f32 %v231, %v262
    %v271 = vmul.f32 %v231, %v263
    %v272 = vsub.f32 %v256, %v268
    %v273 = vsub.f32 %v257, %v269
    %v274 = vsub.f32 %v258, %v270
    %v275 = vsub.f32 %v259, %v271
    %v276 = vmul.f32 %v230, %v260
    %v277 = vmul.f32 %v230, %v261
    %v278 = vmul.f32 %v230, %v262
    %v279 = vmul.f32 %v230, %v263
    %v280 = vadd.f32 %v226, %v276
    %v281 = vadd.f32 %v227, %v277
    %v282 = vadd.f32 %v228, %v278
    %v283 = vadd.f32 %v229, %v279
    %v284 = vmul.f32 %v231, %v244
    %v285 = vmul.f32 %v231, %v245
    %v286 = vmul.f32 %v231, %v246
    %v287 = vmul.f32 %v231, %v247
    %v288 = vadd.f32 %v280, %v284
    %v289 = vadd.f32 %v281, %v285
    %v290 = vadd.f32 %v282, %v286
    %v291 = vadd.f32 %v283, %v287
    %292 = vst [vmem:[#allocation7] sm:$0x3] %v272
    %293 = vst [vmem:[#allocation7 + $0x2] sm:$0x3] %v273
    %294 = vst [vmem:[#allocation7 + $0x4] sm:$0x3] %v274
    %295 = vst [vmem:[#allocation7 + $0x6] sm:$0x3] %v275
    %s296 = scalar_lea.vmem [#allocation7], 8
    %297 = vst [vmem:[%s296] sm:$0x3] %v288
    %298 = vst [vmem:[%s296 + $0x2] sm:$0x3] %v289
    %299 = vst [vmem:[%s296 + $0x4] sm:$0x3] %v290
    %300 = vst [vmem:[%s296 + $0x6] sm:$0x3] %v291
    // Predicated region
    $region18: #{tpu_custom_call.1} parent=1 // pred_check
      _
    $region19: #{tpu_custom_call.1} parent=1 // pred_check_branch
      %302 = sbr.rel (0) target = $region21
    $region20: #{tpu_custom_call.1} parent=1 // pred_region
      %304 = vsyncadd [#allocation4], 0
      %s305 = sshll.u32 [#allocation7], 4
      %s306 = int_to_ptr.vmem [resolvable:$true] %s305
      %s307 = sshll.u32 %s2, 4
      %s308 = int_to_ptr.hbm [resolvable:$true] %s307
      %313 = dma.vmem_to_hbm [thread:$0]  %s306, 256, %s308, [#allocation4], 32, 32, 2
    $region21: #{tpu_custom_call.1} parent=1 // pred_fallthru
      _
    // Predicated region
    $region22: #{tpu_custom_call.1} parent=1 // pred_check
      _
    $region23: #{tpu_custom_call.1} parent=1 // pred_check_branch
      %315 = sbr.rel (0) target = $region25
    $region24: #{tpu_custom_call.1} parent=1 // pred_region
      %317 = dma.done [#allocation4], 256
    $region25: #{tpu_custom_call.1} parent=1 // pred_fallthru
      _
    %318 = vsyncpa [#allocation3], 1
    %319 = vsyncpa [#allocation6], 1
    %320 = vsyncpa [#allocation4], 1

</llo_original>
